<compile_context>
chip_gen: v7x
topology: tpu7x:2x2x1
jax: 0.10.0
libtpu: 0.0.40
codegen_flags: <defaults>
</compile_context>

<pallas_src>
import jax
import jax.numpy as jnp
from jax import lax
from jax.experimental import pallas as pl
from jax.experimental.pallas import tpu as pltpu

LANE = 128


# ----------------------------------------------------------------------------
# Fused kernel.
#   inputs : X (N,Cin) f32, H (N,E) bf16 incidence, W0 (Cin,Chid) f32,
#            b0 (1,Chid) f32, W1p (Chid,ncls_p) f32, b1p (1,ncls_p) f32
#   output : Y (N, ncls_p) f32   (ncls_p = ncls rounded up to 128 lanes)
# ----------------------------------------------------------------------------
def hgnn_fused_kernel(x_ref, h_ref, w0_ref, b0_ref, w1_ref, b1_ref, o_ref):
    f32 = jnp.float32
    bf16 = jnp.bfloat16

    # ---- hypergraph normalization, built in-kernel from H (f32 math) --------
    hmat = h_ref[...].astype(f32)                       # (N, E), entries 0/1
    d_v = jnp.sum(hmat, axis=1, keepdims=True)          # (N, 1) vertex degrees
    d_e = jnp.sum(hmat, axis=0, keepdims=True)          # (1, E) edge degrees
    inv_sqrt_dv = jnp.where(d_v > 0.0, lax.rsqrt(d_v), 0.0)
    inv_de = jnp.where(d_e > 0.0, 1.0 / d_e, 0.0)
    a = inv_sqrt_dv * hmat                               # (N, E) = Dv^{-1/2} H
    bm = a * inv_de                                      # (N, E) = Dv^{-1/2} H De^{-1}

    a16 = a.astype(bf16)                                 # MXU operands in bf16
    bm16 = bm.astype(bf16)

    def smooth(z):
        # L @ z = Bm @ (A^T @ z); A^T never materialized (contract dim 0 of A).
        t = lax.dot_general(a16, z.astype(bf16),
                            dimension_numbers=(((0,), (0,)), ((), ())),
                            preferred_element_type=f32)          # (E, C)
        return jnp.dot(bm16, t.astype(bf16),
                       preferred_element_type=f32)               # (N, C)

    # ---- layer 0 : relu( L @ (X @ W0 + b0) ) --------------------------------
    z0 = jnp.dot(x_ref[...].astype(bf16), w0_ref[...].astype(bf16),
                 preferred_element_type=f32) + b0_ref[...]       # (N, Chid) f32
    h0 = jnp.maximum(smooth(z0), 0.0)
    # TODO(synk): training-mode dropout not implemented (identity at inference).

    # ---- layer 1 : L @ (H0 @ W1 + b1)   (padded to 128 lanes, no activation) -
    z1 = jnp.dot(h0.astype(bf16), w1_ref[...].astype(bf16),
                 preferred_element_type=f32) + b1_ref[...]       # (N, ncls_p)
    o_ref[...] = smooth(z1).astype(o_ref.dtype)


# ----------------------------------------------------------------------------
# Wrapper: pad the classifier to a lane-dense width and launch the kernel.
# ----------------------------------------------------------------------------
def hgnn_forward(X, H, params):
    (W0, b0), (W1, b1) = params
    N, Cin = X.shape
    E = H.shape[1]
    Chid = W0.shape[1]
    ncls = W1.shape[1]

    # Lane-dense output: pad final projection to a multiple of 128 columns.
    ncls_p = pl.cdiv(ncls, LANE) * LANE
    W1p = jnp.zeros((Chid, ncls_p), jnp.float32).at[:, :ncls].set(W1)
    b1p = jnp.zeros((1, ncls_p), jnp.float32).at[:, :ncls].set(b1)

    # 0/1 incidence matrix is exactly representable in bf16 -> halve HBM bytes
    # of the dominant (N, E) operand.
    H16 = H.astype(jnp.bfloat16)

    flops = int(2 * N * Cin * Chid                       # X @ W0
                + 2 * 2 * N * E * Chid                   # factored L-apply, layer 0
                + 2 * N * Chid * ncls_p                  # H0 @ W1p
                + 2 * 2 * N * E * ncls_p)                # factored L-apply, layer 1
    bytes_accessed = int(X.size * 4 + H16.size * 2 + W0.size * 4 + b0.size * 4
                         + W1p.size * 4 + b1p.size * 4 + N * ncls_p * 4)

    vmem = lambda: pl.BlockSpec(memory_space=pltpu.MemorySpace.VMEM)
    out_p = pl.pallas_call(
        hgnn_fused_kernel,
        out_shape=jax.ShapeDtypeStruct((N, ncls_p), X.dtype),
        in_specs=[vmem() for _ in range(6)],
        out_specs=vmem(),
        compiler_params=pltpu.CompilerParams(
            vmem_limit_bytes=32 * 1024 * 1024),          # sized for v7x scoped VMEM
        cost_estimate=pl.CostEstimate(flops=flops, transcendentals=N,
                                      bytes_accessed=bytes_accessed),
    )(X, H16, W0, b0, W1p, b1p)
    return out_p[:, :ncls]


# ----------------------------------------------------------------------------
# Pure-JAX f32 reference (dense Laplacian, mirrors PyTorch semantics).
# ----------------------------------------------------------------------------
def hgnn_forward_ref(X, H, params):
    (W0, b0), (W1, b1) = params
    Hf = H.astype(jnp.float32)
    d_v = jnp.sum(Hf, axis=1)
    d_e = jnp.sum(Hf, axis=0)
    inv_sqrt_dv = jnp.where(d_v > 0, 1.0 / jnp.sqrt(d_v), 0.0)
    inv_de = jnp.where(d_e > 0, 1.0 / d_e, 0.0)
    L = (inv_sqrt_dv[:, None] * (Hf * inv_de[None, :])) @ (Hf.T * inv_sqrt_dv[None, :])
    Xh = jnp.maximum(L @ (X @ W0 + b0), 0.0)
    return L @ (Xh @ W1 + b1)


def init_linear(key, fan_in, fan_out):
    # PyTorch nn.Linear default init: U(-1/sqrt(fan_in), 1/sqrt(fan_in))
    kw, kb = jax.random.split(key)
    bound = 1.0 / jnp.sqrt(jnp.float32(fan_in))
    W = jax.random.uniform(kw, (fan_in, fan_out), jnp.float32, -bound, bound)
    b = jax.random.uniform(kb, (1, fan_out), jnp.float32, -bound, bound)
    return W, b


if __name__ == "__main__":
    key = jax.random.PRNGKey(0)
    k_x, k_h, k_l0, k_l1 = jax.random.split(key, 4)

    N = 64            # number of vertices
    E = 32            # number of hyperedges
    C_in = 16
    C_hid = 32
    num_classes = 8

    # vertex features
    X = jax.random.normal(k_x, (N, C_in), jnp.float32)

    # random hypergraph incidence matrix; guarantee no empty vertex/edge
    H = (jax.random.uniform(k_h, (N, E)) < 0.2).astype(jnp.float32)
    H = H.at[jnp.arange(N), jnp.arange(N) % E].set(1.0)

    # deterministic parameters
    params = (init_linear(k_l0, C_in, C_hid),
              init_linear(k_l1, C_hid, num_classes))

    out = hgnn_forward(X, H, params)
    out = jax.block_until_ready(out)

    ref = hgnn_forward_ref(X, H, params)
    assert out.shape == (N, num_classes)
    # bf16 MXU operands vs f32 dense-L reference -> relaxed tolerance.
    assert jnp.allclose(out, ref, atol=2e-2, rtol=2e-2), "mismatch vs JAX reference"

    print("KERNEL_OK")
</pallas_src>

<mosaic_0001>
module attributes {stable_mosaic.version = 11 : i64} {
  func.func @hgnn_fused_kernel(%arg0: memref<64x16xf32, #tpu.memory_space<vmem>>, %arg1: memref<64x32xbf16, #tpu.memory_space<vmem>>, %arg2: memref<16x32xf32, #tpu.memory_space<vmem>>, %arg3: memref<1x32xf32, #tpu.memory_space<vmem>>, %arg4: memref<32x128xf32, #tpu.memory_space<vmem>>, %arg5: memref<1x128xf32, #tpu.memory_space<vmem>>, %arg6: memref<64x128xf32, #tpu.memory_space<vmem>>) attributes {dimension_semantics = [], scalar_prefetch = 0 : i64, scratch_operands = 0 : i64, tpu.core_type = #tpu.core_type<tc>} {
    %c0 = arith.constant 0 : index
    %c0_0 = arith.constant 0 : index
    %0 = vector.load %arg1[%c0, %c0_0] : memref<64x32xbf16, #tpu.memory_space<vmem>>, vector<64x32xbf16>
    %1 = arith.extf %0 : vector<64x32xbf16> to vector<64x32xf32>
    %cst = arith.constant dense<0.000000e+00> : vector<64xf32>
    %2 = vector.multi_reduction <add>, %1, %cst [1] : vector<64x32xf32> to vector<64xf32>
    %3 = vector.shape_cast %2 : vector<64xf32> to vector<64x1xf32>
    %cst_1 = arith.constant dense<0.000000e+00> : vector<32xf32>
    %4 = vector.multi_reduction <add>, %1, %cst_1 [0] : vector<64x32xf32> to vector<32xf32>
    %5 = vector.shape_cast %4 : vector<32xf32> to vector<1x32xf32>
    %cst_2 = arith.constant 0.000000e+00 : f32
    %6 = vector.broadcast %cst_2 : f32 to vector<64x1xf32>
    %7 = arith.cmpf ogt, %3, %6 : vector<64x1xf32>
    %8 = math.rsqrt %3 : vector<64x1xf32>
    %cst_3 = arith.constant 0.000000e+00 : f32
    %9 = vector.broadcast %cst_3 : f32 to vector<64x1xf32>
    %10 = arith.select %7, %8, %9 : vector<64x1xi1>, vector<64x1xf32>
    %cst_4 = arith.constant 0.000000e+00 : f32
    %11 = vector.broadcast %cst_4 : f32 to vector<1x32xf32>
    %12 = arith.cmpf ogt, %5, %11 : vector<1x32xf32>
    %cst_5 = arith.constant 1.000000e+00 : f32
    %13 = vector.broadcast %cst_5 : f32 to vector<1x32xf32>
    %14 = arith.divf %13, %5 : vector<1x32xf32>
    %cst_6 = arith.constant 0.000000e+00 : f32
    %15 = vector.broadcast %cst_6 : f32 to vector<1x32xf32>
    %16 = arith.select %12, %14, %15 : vector<1x32xi1>, vector<1x32xf32>
    %17 = vector.broadcast %10 : vector<64x1xf32> to vector<64x32xf32>
    %18 = arith.mulf %17, %1 : vector<64x32xf32>
    %19 = vector.broadcast %16 : vector<1x32xf32> to vector<64x32xf32>
    %20 = arith.mulf %18, %19 : vector<64x32xf32>
    %21 = arith.truncf %18 : vector<64x32xf32> to vector<64x32xbf16>
    %22 = arith.truncf %20 : vector<64x32xf32> to vector<64x32xbf16>
    %c0_7 = arith.constant 0 : index
    %c0_8 = arith.constant 0 : index
    %23 = vector.load %arg0[%c0_7, %c0_8] : memref<64x16xf32, #tpu.memory_space<vmem>>, vector<64x16xf32>
    %24 = arith.truncf %23 : vector<64x16xf32> to vector<64x16xbf16>
    %c0_9 = arith.constant 0 : index
    %c0_10 = arith.constant 0 : index
    %25 = vector.load %arg2[%c0_9, %c0_10] : memref<16x32xf32, #tpu.memory_space<vmem>>, vector<16x32xf32>
    %26 = arith.truncf %25 : vector<16x32xf32> to vector<16x32xbf16>
    %cst_11 = arith.constant dense<0.000000e+00> : vector<64x32xf32>
    %27 = tpu.matmul %24, %26, %cst_11 {dimension_numbers = #tpu.dot_dimension_numbers<[1], [0], [0], [1], [0, 0, 1, 1], [], []>} : vector<64x16xbf16>, vector<16x32xbf16>, vector<64x32xf32> -> vector<64x32xf32>
    %c0_12 = arith.constant 0 : index
    %c0_13 = arith.constant 0 : index
    %28 = vector.load %arg3[%c0_12, %c0_13] : memref<1x32xf32, #tpu.memory_space<vmem>>, vector<1x32xf32>
    %29 = vector.broadcast %28 : vector<1x32xf32> to vector<64x32xf32>
    %30 = arith.addf %27, %29 : vector<64x32xf32>
    %31 = arith.truncf %30 : vector<64x32xf32> to vector<64x32xbf16>
    %cst_14 = arith.constant dense<0.000000e+00> : vector<32x32xf32>
    %32 = tpu.matmul %21, %31, %cst_14 {dimension_numbers = #tpu.dot_dimension_numbers<[0], [0], [1], [1], [0, 1, 1, 1], [], []>} : vector<64x32xbf16>, vector<64x32xbf16>, vector<32x32xf32> -> vector<32x32xf32>
    %33 = arith.truncf %32 : vector<32x32xf32> to vector<32x32xbf16>
    %cst_15 = arith.constant dense<0.000000e+00> : vector<64x32xf32>
    %34 = tpu.matmul %22, %33, %cst_15 {dimension_numbers = #tpu.dot_dimension_numbers<[1], [0], [0], [1], [0, 0, 1, 1], [], []>} : vector<64x32xbf16>, vector<32x32xbf16>, vector<64x32xf32> -> vector<64x32xf32>
    %cst_16 = arith.constant 0.000000e+00 : f32
    %35 = vector.broadcast %cst_16 : f32 to vector<64x32xf32>
    %36 = arith.maximumf %34, %35 : vector<64x32xf32>
    %37 = arith.truncf %36 : vector<64x32xf32> to vector<64x32xbf16>
    %c0_17 = arith.constant 0 : index
    %c0_18 = arith.constant 0 : index
    %38 = vector.load %arg4[%c0_17, %c0_18] : memref<32x128xf32, #tpu.memory_space<vmem>>, vector<32x128xf32>
    %39 = arith.truncf %38 : vector<32x128xf32> to vector<32x128xbf16>
    %cst_19 = arith.constant dense<0.000000e+00> : vector<64x128xf32>
    %40 = tpu.matmul %37, %39, %cst_19 {dimension_numbers = #tpu.dot_dimension_numbers<[1], [0], [0], [1], [0, 0, 1, 1], [], []>} : vector<64x32xbf16>, vector<32x128xbf16>, vector<64x128xf32> -> vector<64x128xf32>
    %c0_20 = arith.constant 0 : index
    %c0_21 = arith.constant 0 : index
    %41 = vector.load %arg5[%c0_20, %c0_21] : memref<1x128xf32, #tpu.memory_space<vmem>>, vector<1x128xf32>
    %42 = vector.broadcast %41 : vector<1x128xf32> to vector<64x128xf32>
    %43 = arith.addf %40, %42 : vector<64x128xf32>
    %44 = arith.truncf %43 : vector<64x128xf32> to vector<64x128xbf16>
    %cst_22 = arith.constant dense<0.000000e+00> : vector<32x128xf32>
    %45 = tpu.matmul %21, %44, %cst_22 {dimension_numbers = #tpu.dot_dimension_numbers<[0], [0], [1], [1], [0, 1, 1, 1], [], []>} : vector<64x32xbf16>, vector<64x128xbf16>, vector<32x128xf32> -> vector<32x128xf32>
    %46 = arith.truncf %45 : vector<32x128xf32> to vector<32x128xbf16>
    %cst_23 = arith.constant dense<0.000000e+00> : vector<64x128xf32>
    %47 = tpu.matmul %22, %46, %cst_23 {dimension_numbers = #tpu.dot_dimension_numbers<[1], [0], [0], [1], [0, 0, 1, 1], [], []>} : vector<64x32xbf16>, vector<32x128xbf16>, vector<64x128xf32> -> vector<64x128xf32>
    %c0_24 = arith.constant 0 : index
    %c0_25 = arith.constant 0 : index
    %48 = vector.load %arg6[%c0_24, %c0_25] : memref<64x128xf32, #tpu.memory_space<vmem>>, vector<64x128xf32>
    tpu.vector_store %arg6[%c0_24, %c0_25], %47 {strides = array<i32>} : memref<64x128xf32, #tpu.memory_space<vmem>>, vector<64x128xf32>,
    return
  }
}

</mosaic_0001>

<llo_original>
// kernel: tpu_custom_call.1
$region0: #{tpu_custom_call.1}
  #allocation0 [shape = 'u32[]', space=smem, size = 0x4, offset = 0x4, fixed_abs, tag = 'smem constant byte address 0x4 - core index']
  #allocation1 [shape = 'u32[144,128]{1,0:T(1,128)}', space=vmem, size = 0x12000, scoped, tag = 'internal scratch']
  %s0 = inlined_call_operand.vmem [shape: f32[64,16], index: 0, kind: input, shape index: {}]
  %s1 = inlined_call_operand.vmem [shape: bf16[64,32], index: 1, kind: input, shape index: {}]
  %s2 = inlined_call_operand.vmem [shape: f32[16,32], index: 2, kind: input, shape index: {}]
  %s3 = inlined_call_operand.vmem [shape: f32[1,32], index: 3, kind: input, shape index: {}]
  %s4 = inlined_call_operand.vmem [shape: f32[32,128], index: 4, kind: input, shape index: {}]
  %s5 = inlined_call_operand.vmem [shape: f32[1,128], index: 5, kind: input, shape index: {}]
  %s6 = inlined_call_operand.hbm [shape: f32[64,128], index: 6, kind: output, shape index: {}]
  %s7 = sld [smem:[#allocation0]]
  $region34: #{tpu_custom_call.1} parent=0
    _
  %s9 = ssub.s32 1, %s7
  %s10 = scalar_select 0, %s9, %s7
  $region1: #{tpu_custom_call.1} parent=0
    #allocation2 [shape = 'u8[32768]{0}', space=vmem, size = 0x8000, scoped, tag = 'output window, operand 0, single buffered']
    #allocation3 [shape = 's32[1]{0}', space=sflag, size = 0x4, scoped, tag = 'scoped memory for tpu_custom_call.1']
    %11 = vsyncpa [#allocation3], 0
    // Predicated region
    $region2: #{tpu_custom_call.1} parent=1 // pred_check
      _
    $region3: #{tpu_custom_call.1} parent=1 // pred_check_branch
      %13 = sbr.rel (0) target = $region5
    $region4: #{tpu_custom_call.1} parent=1 // pred_region
      _
    $region5: #{tpu_custom_call.1} parent=1 // pred_fallthru
      _
    // Predicated region
    $region6: #{tpu_custom_call.1} parent=1 // pred_check
      _
    $region7: #{tpu_custom_call.1} parent=1 // pred_check_branch
      %15 = sbr.rel (0) target = $region9
    $region8: #{tpu_custom_call.1} parent=1 // pred_region
      _
    $region9: #{tpu_custom_call.1} parent=1 // pred_fallthru
      _
    // Predicated region
    $region10: #{tpu_custom_call.1} parent=1 // pred_check
      _
    $region11: #{tpu_custom_call.1} parent=1 // pred_check_branch
      %17 = sbr.rel (0) target = $region13
    $region12: #{tpu_custom_call.1} parent=1 // pred_region
      _
    $region13: #{tpu_custom_call.1} parent=1 // pred_fallthru
      _
    // Predicated region
    $region14: #{tpu_custom_call.1} parent=1 // pred_check
      _
    $region15: #{tpu_custom_call.1} parent=1 // pred_check_branch
      %19 = sbr.rel (0) target = $region17
    $region16: #{tpu_custom_call.1} parent=1 // pred_region
      _
    $region17: #{tpu_custom_call.1} parent=1 // pred_fallthru
      _
    // Predicated region
    $region18: #{tpu_custom_call.1} parent=1 // pred_check
      _
    $region19: #{tpu_custom_call.1} parent=1 // pred_check_branch
      %21 = sbr.rel (0) target = $region21
    $region20: #{tpu_custom_call.1} parent=1 // pred_region
      _
    $region21: #{tpu_custom_call.1} parent=1 // pred_fallthru
      _
    // Predicated region
    $region22: #{tpu_custom_call.1} parent=1 // pred_check
      _
    $region23: #{tpu_custom_call.1} parent=1 // pred_check_branch
      %23 = sbr.rel (0) target = $region25
    $region24: #{tpu_custom_call.1} parent=1 // pred_region
      _
    $region25: #{tpu_custom_call.1} parent=1 // pred_fallthru
      _
    %v25 = vld [vmem:[%s1] sm:$0xf]
    %v26 = vld [vmem:[%s1 + $0x4] sm:$0xf]
    %v27 = vld [vmem:[%s1 + $0x8] sm:$0xf]
    %v28 = vld [vmem:[%s1 + $0xc] sm:$0xf]
    %v29 = vld [vmem:[%s1 + $0x10] sm:$0xf]
    %v30 = vld [vmem:[%s1 + $0x14] sm:$0xf]
    %v31 = vld [vmem:[%s1 + $0x18] sm:$0xf]
    %v32 = vld [vmem:[%s1 + $0x1c] sm:$0xf]
    %v33 = vunpack.c.l.bf16 %v25
    %v34 = vunpack.c.l.bf16 %v26
    %v35 = vunpack.c.l.bf16 %v27
    %v36 = vunpack.c.l.bf16 %v28
    %v37 = vunpack.c.l.bf16 %v29
    %v38 = vunpack.c.l.bf16 %v30
    %v39 = vunpack.c.l.bf16 %v31
    %v40 = vunpack.c.l.bf16 %v32
    %vm41 = vcmask 261120
    %v42 = vsel %vm41, %v33, 0.0
    %43 = vadd.xlane.f32.xlu0 %v42
    %v44 = vpop.xlane.xlu0 %43
    %v45 = vsel %vm41, %v34, 0.0
    %46 = vadd.xlane.f32.xlu0 %v45
    %v47 = vpop.xlane.xlu0 %46
    %v48 = vsel %vm41, %v35, 0.0
    %49 = vadd.xlane.f32.xlu0 %v48
    %v50 = vpop.xlane.xlu0 %49
    %v51 = vsel %vm41, %v36, 0.0
    %52 = vadd.xlane.f32.xlu0 %v51
    %v53 = vpop.xlane.xlu0 %52
    %v54 = vsel %vm41, %v37, 0.0
    %55 = vadd.xlane.f32.xlu0 %v54
    %v56 = vpop.xlane.xlu0 %55
    %v57 = vsel %vm41, %v38, 0.0
    %58 = vadd.xlane.f32.xlu0 %v57
    %v59 = vpop.xlane.xlu0 %58
    %v60 = vsel %vm41, %v39, 0.0
    %61 = vadd.xlane.f32.xlu0 %v60
    %v62 = vpop.xlane.xlu0 %61
    %v63 = vsel %vm41, %v40, 0.0
    %64 = vadd.xlane.f32.xlu0 %v63
    %v65 = vpop.xlane.xlu0 %64
    %v66 = vadd.f32 %v42, %v45
    %v67 = vadd.f32 %v66, %v48
    %v68 = vadd.f32 %v67, %v51
    %v69 = vadd.f32 %v68, %v54
    %v70 = vadd.f32 %v69, %v57
    %v71 = vadd.f32 %v70, %v60
    %v72 = vadd.f32 %v71, %v63
    %v73 = vrot.slane %v72, 4
    %v74 = vadd.f32 %v72, %v73
    %v75 = vrot.slane %v74, 2
    %v76 = vadd.f32 %v74, %v75
    %v77 = vrot.slane %v76, 1
    %v78 = vadd.f32 %v76, %v77
    %vm79 = vcmp.gt.f32.partialorder %v44, 0.0
    %vm80 = vcmp.gt.f32.partialorder %v47, 0.0
    %vm81 = vcmp.gt.f32.partialorder %v50, 0.0
    %vm82 = vcmp.gt.f32.partialorder %v53, 0.0
    %vm83 = vcmp.gt.f32.partialorder %v56, 0.0
    %vm84 = vcmp.gt.f32.partialorder %v59, 0.0
    %vm85 = vcmp.gt.f32.partialorder %v62, 0.0
    %vm86 = vcmp.gt.f32.partialorder %v65, 0.0
    %v87 = vrsqrt.pop %v44
    %v88 = vrsqrt.pop %v47
    %v89 = vrsqrt.pop %v50
    %v90 = vrsqrt.pop %v53
    %v91 = vrsqrt.pop %v56
    %v92 = vrsqrt.pop %v59
    %v93 = vrsqrt.pop %v62
    %v94 = vrsqrt.pop %v65
    %v95 = vsel %vm79, %v87, 0.0
    %v96 = vsel %vm80, %v88, 0.0
    %v97 = vsel %vm81, %v89, 0.0
    %v98 = vsel %vm82, %v90, 0.0
    %v99 = vsel %vm83, %v91, 0.0
    %v100 = vsel %vm84, %v92, 0.0
    %v101 = vsel %vm85, %v93, 0.0
    %v102 = vsel %vm86, %v94, 0.0
    %vm103 = vcmp.gt.f32.partialorder %v78, 0.0
    %v104 = vrcp.pop %v78
    %v105 = vmul.f32 1.0, %v104
    %v106 = vsel %vm103, %v105, 0.0
    %v107 = vmul.f32 %v95, %v33
    %v108 = vmul.f32 %v96, %v34
    %v109 = vmul.f32 %v97, %v35
    %v110 = vmul.f32 %v98, %v36
    %v111 = vmul.f32 %v99, %v37
    %v112 = vmul.f32 %v100, %v38
    %v113 = vmul.f32 %v101, %v39
    %v114 = vmul.f32 %v102, %v40
    %v115 = vmul.f32 %v107, %v106
    %v116 = vmul.f32 %v108, %v106
    %v117 = vmul.f32 %v109, %v106
    %v118 = vmul.f32 %v110, %v106
    %v119 = vmul.f32 %v111, %v106
    %v120 = vmul.f32 %v112, %v106
    %v121 = vmul.f32 %v113, %v106
    %v122 = vmul.f32 %v114, %v106
    %v123 = vpack.c.bf16 %v108, %v107
    %v124 = vpack.c.bf16 %v110, %v109
    %v125 = vpack.c.bf16 %v112, %v111
    %v126 = vpack.c.bf16 %v114, %v113
    %v127 = vpack.c.bf16 %v116, %v115
    %v128 = vpack.c.bf16 %v118, %v117
    %v129 = vpack.c.bf16 %v120, %v119
    %v130 = vpack.c.bf16 %v122, %v121
    %v131 = vld [vmem:[%s0] sm:$0xff]
    %v132 = vld [vmem:[%s0 + $0x8] sm:$0xff]
    %v133 = vld [vmem:[%s0 + $0x10] sm:$0xff]
    %v134 = vld [vmem:[%s0 + $0x18] sm:$0xff]
    %v135 = vld [vmem:[%s0 + $0x20] sm:$0xff]
    %v136 = vld [vmem:[%s0 + $0x28] sm:$0xff]
    %v137 = vld [vmem:[%s0 + $0x30] sm:$0xff]
    %v138 = vld [vmem:[%s0 + $0x38] sm:$0xff]
    %v139 = vpack.c.bf16 %v132, %v131
    %v140 = vpack.c.bf16 %v134, %v133
    %v141 = vpack.c.bf16 %v136, %v135
    %v142 = vpack.c.bf16 %v138, %v137
    %v143 = vld [vmem:[%s2] sm:$0xff]
    %v144 = vld [vmem:[%s2 + $0x8] sm:$0xff]
    %v145 = vpack.c.bf16 %v144, %v143
    %v146 = vld [vmem:[%s3] sm:$0x1]
    %v148 = vlaneseq
    %v149 = vshrl.u32 %v148, 7
    %v150 = vsub.s32 0, %v149
    %v151 = vrot.slane %v146, %v150
    %vm153 = vcmask 130048
    %v155 = vsel %vm153, %v139, 0
    %v158 = vsel %vm153, %v140, 0
    %v161 = vsel %vm153, %v141, 0
    %v164 = vsel %vm153, %v142, 0
    %166 = vmatprep.subr.bf16.mxu0 0
    %167 = vmatpush1.bf16.msra.mxu0 %v145
    %168 = vmatprep.subr.bf16.mxu0 0
    %169 = vmatpush1.bf16.msra.mxu0 0
    %170 = vmatprep.subr.bf16.mxu0 0
    %171 = vmatpush1.bf16.msra.mxu0 0
    %172 = vmatprep.subr.bf16.mxu0 0
    %173 = vmatpush1.bf16.msra.mxu0 0
    %174 = vmatprep.subr.bf16.mxu0 0
    %175 = vmatpush1.bf16.msra.mxu0 0
    %176 = vmatprep.subr.bf16.mxu0 0
    %177 = vmatpush1.bf16.msra.mxu0 0
    %178 = vmatprep.subr.bf16.mxu0 0
    %179 = vmatpush1.bf16.msra.mxu0 0
    %180 = vmatprep.subr.bf16.mxu0 0
    %181 = vmatpush1.bf16.msra.mxu0 0
    %182 = vmatprep.subr.bf16.mxu0 0
    %183 = vmatpush1.bf16.msra.mxu0 0
    %184 = vmatprep.subr.bf16.mxu0 0
    %185 = vmatpush1.bf16.msra.mxu0 0
    %186 = vmatprep.subr.bf16.mxu0 0
    %187 = vmatpush1.bf16.msra.mxu0 0
    %188 = vmatprep.subr.bf16.mxu0 0
    %189 = vmatpush1.bf16.msra.mxu0 0
    %190 = vmatprep.subr.bf16.mxu0 0
    %191 = vmatpush1.bf16.msra.mxu0 0
    %192 = vmatprep.subr.bf16.mxu0 0
    %193 = vmatpush1.bf16.msra.mxu0 0
    %194 = vmatprep.subr.bf16.mxu0 0
    %195 = vmatpush1.bf16.msra.mxu0 0
    %196 = vmatprep.subr.bf16.mxu0 0
    %197 = vmatpush1.bf16.msra.mxu0 0
    %198 = vmatprep.mubr.bf16.mxu0 0
    %199 = vmatmul.mubr.bf16.gmra.mrb[0].mxu0 %v155
    %v200 = vpop.f32.mrb[0].mxu0
    %v201 = vadd.f32 %v151, %v200
    %v202 = vpop.f32.mrb[0].mxu0
    %v203 = vpop.f32.mrb[0].mxu0
    %v204 = vadd.f32 %v151, %v203
    %v205 = vpop.f32.mrb[0].mxu0
    %206 = vmatprep.mubr.bf16.mxu0 0
    %207 = vmatmul.mubr.bf16.gmra.mrb[0].mxu0 %v158
    %v208 = vpop.f32.mrb[0].mxu0
    %v209 = vadd.f32 %v151, %v208
    %v210 = vpop.f32.mrb[0].mxu0
    %v211 = vpop.f32.mrb[0].mxu0
    %v212 = vadd.f32 %v151, %v211
    %v213 = vpop.f32.mrb[0].mxu0
    %214 = vmatprep.mubr.bf16.mxu0 0
    %215 = vmatmul.mubr.bf16.gmra.mrb[0].mxu0 %v161
    %v216 = vpop.f32.mrb[0].mxu0
    %v217 = vadd.f32 %v151, %v216
    %v218 = vpop.f32.mrb[0].mxu0
    %v219 = vpop.f32.mrb[0].mxu0
    %v220 = vadd.f32 %v151, %v219
    %v221 = vpop.f32.mrb[0].mxu0
    %222 = vmatprep.mubr.bf16.mxu0 0
    %223 = vmatmul.mubr.bf16.gmra.mrb[0].mxu0 %v164
    %v224 = vpop.f32.mrb[0].mxu0
    %v225 = vadd.f32 %v151, %v224
    %v226 = vpop.f32.mrb[0].mxu0
    %v227 = vpop.f32.mrb[0].mxu0
    %v228 = vadd.f32 %v151, %v227
    %v229 = vpop.f32.mrb[0].mxu0
    %230 = vdwg.mxu0
    %v231 = vpack.c.bf16 %v204, %v201
    %v232 = vpack.c.bf16 %v212, %v209
    %v233 = vpack.c.bf16 %v220, %v217
    %v234 = vpack.c.bf16 %v228, %v225
    %235 = vxpose.xlu0.c.b16.start [1/8] %v123, 128
    %236 = vxpose.xlu0.c.b16.cont [2/8] %v124, 128
    %237 = vxpose.xlu0.c.b16.cont [3/8] %v125, 128
    %238 = vxpose.xlu0.c.b16.cont [4/8] %v126, 128
    %239 = vxpose.xlu0.c.b16.cont [5/8] 0, 128
    %240 = vxpose.xlu0.c.b16.cont [6/8] 0, 128
    %241 = vxpose.xlu0.c.b16.cont [7/8] 0, 128
    %242 = vxpose.xlu0.c.b16.end [8/8] 0, 128
    %v243 = vpop.trf.xlu0
    %v244 = vpop.trf.xlu0
    %v245 = vpop.trf.xlu0
    %v246 = vpop.trf.xlu0
    %v247 = vpop.trf.xlu0
    %v248 = vpop.trf.xlu0
    %v249 = vpop.trf.xlu0
    %v250 = vpop.trf.xlu0
    %vm251 = vcmask 523264
    %v253 = vsel %vm251, %v243, 0
    %v256 = vsel %vm251, %v244, 0
    %258 = vmatprep.subr.bf16.mxu0 0
    %259 = vmatpush1.bf16.msra.mxu0 %v231
    %260 = vmatprep.subr.bf16.mxu0 0
    %261 = vmatpush1.bf16.msra.mxu0 %v232
    %262 = vmatprep.subr.bf16.mxu0 0
    %263 = vmatpush1.bf16.msra.mxu0 %v233
    %264 = vmatprep.subr.bf16.mxu0 0
    %265 = vmatpush1.bf16.msra.mxu0 %v234
    %266 = vmatprep.subr.bf16.mxu0 0
    %267 = vmatpush1.bf16.msra.mxu0 0
    %268 = vmatprep.subr.bf16.mxu0 0
    %269 = vmatpush1.bf16.msra.mxu0 0
    %270 = vmatprep.subr.bf16.mxu0 0
    %271 = vmatpush1.bf16.msra.mxu0 0
    %272 = vmatprep.subr.bf16.mxu0 0
    %273 = vmatpush1.bf16.msra.mxu0 0
    %274 = vmatprep.subr.bf16.mxu0 0
    %275 = vmatpush1.bf16.msra.mxu0 0
    %276 = vmatprep.subr.bf16.mxu0 0
    %277 = vmatpush1.bf16.msra.mxu0 0
    %278 = vmatprep.subr.bf16.mxu0 0
    %279 = vmatpush1.bf16.msra.mxu0 0
    %280 = vmatprep.subr.bf16.mxu0 0
    %281 = vmatpush1.bf16.msra.mxu0 0
    %282 = vmatprep.subr.bf16.mxu0 0
    %283 = vmatpush1.bf16.msra.mxu0 0
    %284 = vmatprep.subr.bf16.mxu0 0
    %285 = vmatpush1.bf16.msra.mxu0 0
    %286 = vmatprep.subr.bf16.mxu0 0
    %287 = vmatpush1.bf16.msra.mxu0 0
    %288 = vmatprep.subr.bf16.mxu0 0
    %289 = vmatpush1.bf16.msra.mxu0 0
    %290 = vmatprep.mubr.bf16.mxu0 0
    %291 = vmatmul.mubr.bf16.gmra.mrb[0].mxu0 %v253
    %v292 = vpop.f32.mrb[0].mxu0
    %v293 = vadd.f32 0.0, %v292
    %v294 = vpop.f32.mrb[0].mxu0
    %v295 = vpop.f32.mrb[0].mxu0
    %v296 = vadd.f32 0.0, %v295
    %v297 = vpop.f32.mrb[0].mxu0
    %298 = vmatprep.mubr.bf16.mxu0 0
    %299 = vmatmul.mubr.bf16.gmra.mrb[0].mxu0 %v256
    %v300 = vpop.f32.mrb[0].mxu0
    %v301 = vadd.f32 0.0, %v300
    %v302 = vpop.f32.mrb[0].mxu0
    %v303 = vpop.f32.mrb[0].mxu0
    %v304 = vadd.f32 0.0, %v303
    %v305 = vpop.f32.mrb[0].mxu0
    %306 = vdwg.mxu0
    %v307 = vpack.c.bf16 %v296, %v293
    %v308 = vpack.c.bf16 %v304, %v301
    %v310 = vsel %vm41, %v127, 0
    %v313 = vsel %vm41, %v128, 0
    %v316 = vsel %vm41, %v129, 0
    %v319 = vsel %vm41, %v130, 0
    %321 = vmatprep.subr.bf16.mxu0 0
    %322 = vmatpush1.bf16.msra.mxu0 %v307
    %323 = vmatprep.subr.bf16.mxu0 0
    %324 = vmatpush1.bf16.msra.mxu0 %v308
    %325 = vmatprep.subr.bf16.mxu0 0
    %326 = vmatpush1.bf16.msra.mxu0 0
    %327 = vmatprep.subr.bf16.mxu0 0
    %328 = vmatpush1.bf16.msra.mxu0 0
    %329 = vmatprep.subr.bf16.mxu0 0
    %330 = vmatpush1.bf16.msra.mxu0 0
    %331 = vmatprep.subr.bf16.mxu0 0
    %332 = vmatpush1.bf16.msra.mxu0 0
    %333 = vmatprep.subr.bf16.mxu0 0
    %334 = vmatpush1.bf16.msra.mxu0 0
    %335 = vmatprep.subr.bf16.mxu0 0
    %336 = vmatpush1.bf16.msra.mxu0 0
    %337 = vmatprep.subr.bf16.mxu0 0
    %338 = vmatpush1.bf16.msra.mxu0 0
    %339 = vmatprep.subr.bf16.mxu0 0
    %340 = vmatpush1.bf16.msra.mxu0 0
    %341 = vmatprep.subr.bf16.mxu0 0
    %342 = vmatpush1.bf16.msra.mxu0 0
    %343 = vmatprep.subr.bf16.mxu0 0
    %344 = vmatpush1.bf16.msra.mxu0 0
    %345 = vmatprep.subr.bf16.mxu0 0
    %346 = vmatpush1.bf16.msra.mxu0 0
    %347 = vmatprep.subr.bf16.mxu0 0
    %348 = vmatpush1.bf16.msra.mxu0 0
    %349 = vmatprep.subr.bf16.mxu0 0
    %350 = vmatpush1.bf16.msra.mxu0 0
    %351 = vmatprep.subr.bf16.mxu0 0
    %352 = vmatpush1.bf16.msra.mxu0 0
    %353 = vmatprep.mubr.bf16.mxu0 0
    %354 = vmatmul.mubr.bf16.gmra.mrb[0].mxu0 %v310
    %v355 = vpop.f32.mrb[0].mxu0
    %v356 = vadd.f32 0.0, %v355
    %v357 = vpop.f32.mrb[0].mxu0
    %v358 = vpop.f32.mrb[0].mxu0
    %v359 = vadd.f32 0.0, %v358
    %v360 = vpop.f32.mrb[0].mxu0
    %361 = vmatprep.mubr.bf16.mxu0 0
    %362 = vmatmul.mubr.bf16.gmra.mrb[0].mxu0 %v313
    %v363 = vpop.f32.mrb[0].mxu0
    %v364 = vadd.f32 0.0, %v363
    %v365 = vpop.f32.mrb[0].mxu0
    %v366 = vpop.f32.mrb[0].mxu0
    %v367 = vadd.f32 0.0, %v366
    %v368 = vpop.f32.mrb[0].mxu0
    %369 = vmatprep.mubr.bf16.mxu0 0
    %370 = vmatmul.mubr.bf16.gmra.mrb[0].mxu0 %v316
    %v371 = vpop.f32.mrb[0].mxu0
    %v372 = vadd.f32 0.0, %v371
    %v373 = vpop.f32.mrb[0].mxu0
    %v374 = vpop.f32.mrb[0].mxu0
    %v375 = vadd.f32 0.0, %v374
    %v376 = vpop.f32.mrb[0].mxu0
    %377 = vmatprep.mubr.bf16.mxu0 0
    %378 = vmatmul.mubr.bf16.gmra.mrb[0].mxu0 %v319
    %v379 = vpop.f32.mrb[0].mxu0
    %v380 = vadd.f32 0.0, %v379
    %v381 = vpop.f32.mrb[0].mxu0
    %v382 = vpop.f32.mrb[0].mxu0
    %v383 = vadd.f32 0.0, %v382
    %v384 = vpop.f32.mrb[0].mxu0
    %385 = vdwg.mxu0
    %v386 = vmax.f32 %v356, 0.0
    %v387 = vmax.f32 %v359, 0.0
    %v388 = vmax.f32 %v364, 0.0
    %v389 = vmax.f32 %v367, 0.0
    %v390 = vmax.f32 %v372, 0.0
    %v391 = vmax.f32 %v375, 0.0
    %v392 = vmax.f32 %v380, 0.0
    %v393 = vmax.f32 %v383, 0.0
    %v394 = vpack.c.bf16 %v387, %v386
    %v395 = vpack.c.bf16 %v389, %v388
    %v396 = vpack.c.bf16 %v391, %v390
    %v397 = vpack.c.bf16 %v393, %v392
    %v398 = vld [vmem:[%s4] sm:$0xff]
    %v399 = vld [vmem:[%s4 + $0x8] sm:$0xff]
    %v400 = vld [vmem:[%s4 + $0x10] sm:$0xff]
    %v401 = vld [vmem:[%s4 + $0x18] sm:$0xff]
    %v402 = vpack.c.bf16 %v399, %v398
    %v403 = vpack.c.bf16 %v401, %v400
    %v404 = vld [vmem:[%s5] sm:$0x1]
    %v406 = vlaneseq
    %v407 = vshrl.u32 %v406, 7
    %v408 = vsub.s32 0, %v407
    %v409 = vrot.slane %v404, %v408
    %v412 = vsel %vm41, %v394, 0
    %v415 = vsel %vm41, %v395, 0
    %v418 = vsel %vm41, %v396, 0
    %v421 = vsel %vm41, %v397, 0
    %423 = vmatprep.subr.bf16.mxu0 0
    %424 = vmatpush1.bf16.msra.mxu0 %v402
    %425 = vmatprep.subr.bf16.mxu0 0
    %426 = vmatpush1.bf16.msra.mxu0 %v403
    %427 = vmatprep.subr.bf16.mxu0 0
    %428 = vmatpush1.bf16.msra.mxu0 0
    %429 = vmatprep.subr.bf16.mxu0 0
    %430 = vmatpush1.bf16.msra.mxu0 0
    %431 = vmatprep.subr.bf16.mxu0 0
    %432 = vmatpush1.bf16.msra.mxu0 0
    %433 = vmatprep.subr.bf16.mxu0 0
    %434 = vmatpush1.bf16.msra.mxu0 0
    %435 = vmatprep.subr.bf16.mxu0 0
    %436 = vmatpush1.bf16.msra.mxu0 0
    %437 = vmatprep.subr.bf16.mxu0 0
    %438 = vmatpush1.bf16.msra.mxu0 0
    %439 = vmatprep.subr.bf16.mxu0 0
    %440 = vmatpush1.bf16.msra.mxu0 0
    %441 = vmatprep.subr.bf16.mxu0 0
    %442 = vmatpush1.bf16.msra.mxu0 0
    %443 = vmatprep.subr.bf16.mxu0 0
    %444 = vmatpush1.bf16.msra.mxu0 0
    %445 = vmatprep.subr.bf16.mxu0 0
    %446 = vmatpush1.bf16.msra.mxu0 0
    %447 = vmatprep.subr.bf16.mxu0 0
    %448 = vmatpush1.bf16.msra.mxu0 0
    %449 = vmatprep.subr.bf16.mxu0 0
    %450 = vmatpush1.bf16.msra.mxu0 0
    %451 = vmatprep.subr.bf16.mxu0 0
    %452 = vmatpush1.bf16.msra.mxu0 0
    %453 = vmatprep.subr.bf16.mxu0 0
    %454 = vmatpush1.bf16.msra.mxu0 0
    %455 = vmatprep.mubr.bf16.mxu0 0
    %456 = vmatmul.mubr.bf16.gmra.mrb[0].mxu0 %v412
    %v457 = vpop.f32.mrb[0].mxu0
    %v458 = vadd.f32 %v409, %v457
    %v459 = vpop.f32.mrb[0].mxu0
    %v460 = vpop.f32.mrb[0].mxu0
    %v461 = vadd.f32 %v409, %v460
    %v462 = vpop.f32.mrb[0].mxu0
    %463 = vmatprep.mubr.bf16.mxu0 0
    %464 = vmatmul.mubr.bf16.gmra.mrb[0].mxu0 %v415
    %v465 = vpop.f32.mrb[0].mxu0
    %v466 = vadd.f32 %v409, %v465
    %v467 = vpop.f32.mrb[0].mxu0
    %v468 = vpop.f32.mrb[0].mxu0
    %v469 = vadd.f32 %v409, %v468
    %v470 = vpop.f32.mrb[0].mxu0
    %471 = vmatprep.mubr.bf16.mxu0 0
    %472 = vmatmul.mubr.bf16.gmra.mrb[0].mxu0 %v418
    %v473 = vpop.f32.mrb[0].mxu0
    %v474 = vadd.f32 %v409, %v473
    %v475 = vpop.f32.mrb[0].mxu0
    %v476 = vpop.f32.mrb[0].mxu0
    %v477 = vadd.f32 %v409, %v476
    %v478 = vpop.f32.mrb[0].mxu0
    %479 = vmatprep.mubr.bf16.mxu0 0
    %480 = vmatmul.mubr.bf16.gmra.mrb[0].mxu0 %v421
    %v481 = vpop.f32.mrb[0].mxu0
    %v482 = vadd.f32 %v409, %v481
    %v483 = vpop.f32.mrb[0].mxu0
    %v484 = vpop.f32.mrb[0].mxu0
    %v485 = vadd.f32 %v409, %v484
    %v486 = vpop.f32.mrb[0].mxu0
    %487 = vdwg.mxu0
    %v488 = vpack.c.bf16 %v461, %v458
    %v489 = vpack.c.bf16 %v469, %v466
    %v490 = vpack.c.bf16 %v477, %v474
    %v491 = vpack.c.bf16 %v485, %v482
    %492 = vmatprep.subr.bf16.mxu0 0
    %493 = vmatpush1.bf16.msra.mxu0 %v488
    %494 = vmatprep.subr.bf16.mxu0 0
    %495 = vmatpush1.bf16.msra.mxu0 %v489
    %496 = vmatprep.subr.bf16.mxu0 0
    %497 = vmatpush1.bf16.msra.mxu0 %v490
    %498 = vmatprep.subr.bf16.mxu0 0
    %499 = vmatpush1.bf16.msra.mxu0 %v491
    %500 = vmatprep.subr.bf16.mxu0 0
    %501 = vmatpush1.bf16.msra.mxu0 0
    %502 = vmatprep.subr.bf16.mxu0 0
    %503 = vmatpush1.bf16.msra.mxu0 0
    %504 = vmatprep.subr.bf16.mxu0 0
    %505 = vmatpush1.bf16.msra.mxu0 0
    %506 = vmatprep.subr.bf16.mxu0 0
    %507 = vmatpush1.bf16.msra.mxu0 0
    %508 = vmatprep.subr.bf16.mxu0 0
    %509 = vmatpush1.bf16.msra.mxu0 0
    %510 = vmatprep.subr.bf16.mxu0 0
    %511 = vmatpush1.bf16.msra.mxu0 0
    %512 = vmatprep.subr.bf16.mxu0 0
    %513 = vmatpush1.bf16.msra.mxu0 0
    %514 = vmatprep.subr.bf16.mxu0 0
    %515 = vmatpush1.bf16.msra.mxu0 0
    %516 = vmatprep.subr.bf16.mxu0 0
    %517 = vmatpush1.bf16.msra.mxu0 0
    %518 = vmatprep.subr.bf16.mxu0 0
    %519 = vmatpush1.bf16.msra.mxu0 0
    %520 = vmatprep.subr.bf16.mxu0 0
    %521 = vmatpush1.bf16.msra.mxu0 0
    %522 = vmatprep.subr.bf16.mxu0 0
    %523 = vmatpush1.bf16.msra.mxu0 0
    %524 = vmatprep.mubr.bf16.mxu0 0
    %525 = vmatmul.mubr.bf16.gmra.mrb[0].mxu0 %v253
    %v526 = vpop.f32.mrb[0].mxu0
    %v527 = vadd.f32 0.0, %v526
    %v528 = vpop.f32.mrb[0].mxu0
    %v529 = vpop.f32.mrb[0].mxu0
    %v530 = vadd.f32 0.0, %v529
    %v531 = vpop.f32.mrb[0].mxu0
    %532 = vmatprep.mubr.bf16.mxu0 0
    %533 = vmatmul.mubr.bf16.gmra.mrb[0].mxu0 %v256
    %v534 = vpop.f32.mrb[0].mxu0
    %v535 = vadd.f32 0.0, %v534
    %v536 = vpop.f32.mrb[0].mxu0
    %v537 = vpop.f32.mrb[0].mxu0
    %v538 = vadd.f32 0.0, %v537
    %v539 = vpop.f32.mrb[0].mxu0
    %540 = vdwg.mxu0
    %v541 = vpack.c.bf16 %v530, %v527
    %v542 = vpack.c.bf16 %v538, %v535
    %543 = vmatprep.subr.bf16.mxu0 0
    %544 = vmatpush1.bf16.msra.mxu0 %v541
    %545 = vmatprep.subr.bf16.mxu0 0
    %546 = vmatpush1.bf16.msra.mxu0 %v542
    %547 = vmatprep.subr.bf16.mxu0 0
    %548 = vmatpush1.bf16.msra.mxu0 0
    %549 = vmatprep.subr.bf16.mxu0 0
    %550 = vmatpush1.bf16.msra.mxu0 0
    %551 = vmatprep.subr.bf16.mxu0 0
    %552 = vmatpush1.bf16.msra.mxu0 0
    %553 = vmatprep.subr.bf16.mxu0 0
    %554 = vmatpush1.bf16.msra.mxu0 0
    %555 = vmatprep.subr.bf16.mxu0 0
    %556 = vmatpush1.bf16.msra.mxu0 0
    %557 = vmatprep.subr.bf16.mxu0 0
    %558 = vmatpush1.bf16.msra.mxu0 0
    %559 = vmatprep.subr.bf16.mxu0 0
    %560 = vmatpush1.bf16.msra.mxu0 0
    %561 = vmatprep.subr.bf16.mxu0 0
    %562 = vmatpush1.bf16.msra.mxu0 0
    %563 = vmatprep.subr.bf16.mxu0 0
    %564 = vmatpush1.bf16.msra.mxu0 0
    %565 = vmatprep.subr.bf16.mxu0 0
    %566 = vmatpush1.bf16.msra.mxu0 0
    %567 = vmatprep.subr.bf16.mxu0 0
    %568 = vmatpush1.bf16.msra.mxu0 0
    %569 = vmatprep.subr.bf16.mxu0 0
    %570 = vmatpush1.bf16.msra.mxu0 0
    %571 = vmatprep.subr.bf16.mxu0 0
    %572 = vmatpush1.bf16.msra.mxu0 0
    %573 = vmatprep.subr.bf16.mxu0 0
    %574 = vmatpush1.bf16.msra.mxu0 0
    %575 = vmatprep.mubr.bf16.mxu0 0
    %576 = vmatmul.mubr.bf16.gmra.mrb[0].mxu0 %v310
    %v577 = vpop.f32.mrb[0].mxu0
    %v578 = vadd.f32 0.0, %v577
    %v579 = vpop.f32.mrb[0].mxu0
    %v580 = vpop.f32.mrb[0].mxu0
    %v581 = vadd.f32 0.0, %v580
    %v582 = vpop.f32.mrb[0].mxu0
    %583 = vmatprep.mubr.bf16.mxu0 0
    %584 = vmatmul.mubr.bf16.gmra.mrb[0].mxu0 %v313
    %v585 = vpop.f32.mrb[0].mxu0
    %v586 = vadd.f32 0.0, %v585
    %v587 = vpop.f32.mrb[0].mxu0
    %v588 = vpop.f32.mrb[0].mxu0
    %v589 = vadd.f32 0.0, %v588
    %v590 = vpop.f32.mrb[0].mxu0
    %591 = vmatprep.mubr.bf16.mxu0 0
    %592 = vmatmul.mubr.bf16.gmra.mrb[0].mxu0 %v316
    %v593 = vpop.f32.mrb[0].mxu0
    %v594 = vadd.f32 0.0, %v593
    %v595 = vpop.f32.mrb[0].mxu0
    %v596 = vpop.f32.mrb[0].mxu0
    %v597 = vadd.f32 0.0, %v596
    %v598 = vpop.f32.mrb[0].mxu0
    %599 = vmatprep.mubr.bf16.mxu0 0
    %600 = vmatmul.mubr.bf16.gmra.mrb[0].mxu0 %v319
    %v601 = vpop.f32.mrb[0].mxu0
    %v602 = vadd.f32 0.0, %v601
    %v603 = vpop.f32.mrb[0].mxu0
    %v604 = vpop.f32.mrb[0].mxu0
    %v605 = vadd.f32 0.0, %v604
    %v606 = vpop.f32.mrb[0].mxu0
    %607 = vdwg.mxu0
    %608 = vst [vmem:[#allocation2] sm:$0xff] %v578
    %609 = vst [vmem:[#allocation2 + $0x8] sm:$0xff] %v581
    %610 = vst [vmem:[#allocation2 + $0x10] sm:$0xff] %v586
    %611 = vst [vmem:[#allocation2 + $0x18] sm:$0xff] %v589
    %612 = vst [vmem:[#allocation2 + $0x20] sm:$0xff] %v594
    %613 = vst [vmem:[#allocation2 + $0x28] sm:$0xff] %v597
    %614 = vst [vmem:[#allocation2 + $0x30] sm:$0xff] %v602
    %615 = vst [vmem:[#allocation2 + $0x38] sm:$0xff] %v605
    // Predicated region
    $region26: #{tpu_custom_call.1} parent=1 // pred_check
      _
    $region27: #{tpu_custom_call.1} parent=1 // pred_check_branch
      %617 = sbr.rel (0) target = $region29
    $region28: #{tpu_custom_call.1} parent=1 // pred_region
      %s619 = ssub.s32 1024, 1024
      %620 = vsyncadd [#allocation3], %s619
      %s621 = sshll.u32 [#allocation2], 4
      %s622 = int_to_ptr.vmem [resolvable:$true] %s621
      %627 = dma.vmem_to_hbm [thread:$0]  %s622, 1024, %s6, [#allocation3], 128, 128, 8
    $region29: #{tpu_custom_call.1} parent=1 // pred_fallthru
      _
    // Predicated region
    $region30: #{tpu_custom_call.1} parent=1 // pred_check
      _
    $region31: #{tpu_custom_call.1} parent=1 // pred_check_branch
      %629 = sbr.rel (0) target = $region33
    $region32: #{tpu_custom_call.1} parent=1 // pred_region
      %630 = dma.done [#allocation3], 1024
    $region33: #{tpu_custom_call.1} parent=1 // pred_fallthru
      _
    %631 = vsyncpa [#allocation3], 1

</llo_original>
